<compile_context>
chip_gen: v7x
topology: tpu7x:2x2x1
jax: 0.10.0
libtpu: 0.0.40
codegen_flags: <defaults>
</compile_context>

<pallas_src>
import numpy as np
import jax
import jax.numpy as jnp
from jax.experimental import pallas as pl
from jax.experimental.pallas import tpu as pltpu


# ----------------------------- small helpers --------------------------------

def _round_up(x, m):
    return ((x + m - 1) // m) * m


def _cdiv(a, b):
    return -(-a // b)


def _device_info():
    """Returns (vmem_capacity_bytes, tensorcores_per_chip, target_hbm_bytes_per_step)."""
    try:
        kind = jax.devices()[0].device_kind.lower()
    except Exception:
        kind = ""
    try:
        vmem_cap = int(pltpu.get_tpu_info().vmem_capacity_bytes)
    except Exception:
        vmem_cap = 64 * 1024 * 1024                    # conservative (v7x-sized)
    if "v7" in kind or "7x" in kind:
        return vmem_cap, 2, 10 << 20                   # ~3.2 TB/s HBM, 2 TCs, 64 MiB VMEM
    if "v6" in kind:
        return vmem_cap, 1, 5 << 20                    # ~1.3 TB/s HBM
    if "v5" in kind:
        return vmem_cap, 1, 3 << 20                    # ~0.8 TB/s HBM
    return vmem_cap, 1, 6 << 20


def _choose_tiling(B, hbm_col_bytes, vmem_col_bytes, vmem_cap, num_cores,
                   target_step_bytes):
    """Pick (tb, n_steps, Bp): bytes/step floor, VMEM cap, even grid on multi-TC."""
    B128 = _round_up(B, 128)
    # VMEM cap on tile width: double-buffered streamed blocks kept under ~70% VMEM.
    max_tb = max(128, ((int(0.7 * vmem_cap) // vmem_col_bytes) // 128) * 128)
    # HBM-bytes-per-step floor so the ~0.35us fixed per-step overhead is amortized.
    target_tb = max(128, _round_up(max(128, target_step_bytes // hbm_col_bytes), 128))
    tb_cap = min(max_tb, target_tb)
    if B128 <= tb_cap and (num_cores == 1 or B128 < num_cores * 2048):
        return B128, 1, B128                           # single full-extent tile
    n = max(1, _cdiv(B128, tb_cap))
    if num_cores > 1:
        n = _round_up(max(n, num_cores), num_cores)    # even grid across TensorCores (v7x)
    n = min(n, max(1, B128 // 128))
    tb = _round_up(_cdiv(B128, n), 128)                # padding waste bounded by ~n*128 cols
    return tb, n, n * tb


def _pick_n_chunks(tb, lane_chunk):
    """Static lane-chunk count: divides tb, each chunk a multiple of 128 lanes."""
    if tb < 256:
        return 1
    if lane_chunk is None:
        want = max(1, min(8, tb // 1024))              # ~8 chunks, >=1024 lanes each
    else:
        want = max(1, tb // max(128, int(lane_chunk)))
    want = int(min(want, 16, tb // 128))
    for n in range(want, 0, -1):
        if tb % n == 0 and (tb // n) % 128 == 0:
            return n
    return 1


# ------------------------------- the kernel ---------------------------------

def _make_ffm_kernel(n_chunks, chunk):
    def ffm_kernel(u_ref, v_ref, lb_ref, out_ref):
        # Static chunking over the lane (batch) axis keeps the f32 temporaries
        # (u/v casts and the product) at O(P*D*chunk) instead of O(P*D*tb).
        for c in range(n_chunks):
            sl = slice(c * chunk, (c + 1) * chunk)
            u = u_ref[:, sl].astype(jnp.float32)            # (P*D, chunk)
            v = v_ref[:, sl].astype(jnp.float32)
            cross = jnp.sum(u * v, axis=0, keepdims=True)   # (1, chunk) sublane reduce
            # linbias row already holds sum_f(linear) + bias in f32.
            out_ref[:, sl] = jax.nn.sigmoid(cross + lb_ref[:, sl])
    return ffm_kernel


# ------------------------------- the wrapper ---------------------------------

def ffm_forward(x, cross_tables, linear_table, bias, field_dim, embed_dim,
                *, tb=None, lane_chunk=None, slab_dtype=jnp.bfloat16):
    """x: (B, F) int32.  cross_tables: (F, V, D) f32.  linear_table: (V, 1).  bias: (1,)."""
    B, F = x.shape
    D = int(embed_dim)
    assert cross_tables.shape[0] == F and cross_tables.shape[2] == D

    offsets = jnp.asarray(np.concatenate([[0], np.cumsum(field_dim)[:-1]]),
                          dtype=jnp.int32)
    idx = x.astype(jnp.int32) + offsets[None, :]            # (B, F) global ids

    # pair p = (i, j), i < j:
    #   u[p, d, b] = table_{j_p}[ x_{b, i_p} ][d]   (torch: embeddings[:, j*F + i])
    #   v[p, d, b] = table_{i_p}[ x_{b, j_p} ][d]   (torch: embeddings[:, i*F + j])
    pairs = [(i, j) for i in range(F) for j in range(i + 1, F)]
    P = len(pairs)
    PD = P * D
    i_idx = jnp.asarray([p[0] for p in pairs], dtype=jnp.int32)
    j_idx = jnp.asarray([p[1] for p in pairs], dtype=jnp.int32)

    slab_bytes = np.dtype(slab_dtype).itemsize
    hbm_col_bytes = 2 * PD * slab_bytes + 4 + 4             # u+v read, linbias read, out write
    sub_tile = 16 if slab_bytes == 2 else 8                 # sublane tiling of slab dtype
    # double-buffered VMEM footprint per batch column (incl. sublane padding)
    vmem_col_bytes = 2 * (2 * _round_up(PD, sub_tile) * slab_bytes + 8 * 4 + 8 * 4)

    vmem_cap, num_cores, target_step_bytes = _device_info()

    if tb is None:
        tb, n_steps, Bp = _choose_tiling(B, hbm_col_bytes, vmem_col_bytes,
                                         vmem_cap, num_cores, target_step_bytes)
    else:
        tb = int(tb)
        if tb >= 128 and tb % 128 != 0:
            tb = _round_up(tb, 128)       # lane tiles must be 128-aligned unless full-extent
        Bp = _round_up(B, tb)
        n_steps = Bp // tb

    n_chunks = _pick_n_chunks(tb, lane_chunk)
    chunk = tb // n_chunks

    # ---- glue: data-dependent gathers stay in XLA, emitted already in kernel layout
    idx_p = jnp.pad(idx, ((0, Bp - B), (0, 0)))             # pad indices (id 0 is valid)
    idx_t = idx_p.T                                         # (F, Bp) batch-in-lanes ids

    ct = cross_tables.astype(slab_dtype)                    # cast tables once -> gathers move bf16
    d_ar = jnp.arange(D, dtype=jnp.int32)
    u_t = ct[j_idx[:, None, None], idx_t[i_idx][:, None, :], d_ar[None, :, None]]  # (P, D, Bp)
    v_t = ct[i_idx[:, None, None], idx_t[j_idx][:, None, :], d_ar[None, :, None]]  # (P, D, Bp)
    u_t = u_t.reshape(PD, Bp)                               # reduction axis -> sublanes
    v_t = v_t.reshape(PD, Bp)

    # pre-reduced linear term + bias: one f32 row (4 B/col) instead of an (F, Bp) slab
    linbias = (jnp.sum(linear_table[idx_p, 0], axis=1) + bias[0]).astype(jnp.float32)
    linbias = linbias.reshape(1, Bp)

    cost = pl.CostEstimate(
        flops=int(Bp) * (2 * PD + 2),
        transcendentals=int(Bp),
        bytes_accessed=int(Bp) * hbm_col_bytes,
    )
    dbuf_bytes = tb * vmem_col_bytes
    vmem_limit = int(min(0.9 * vmem_cap,
                         max(32 * 1024 * 1024, int(1.3 * dbuf_bytes) + (8 << 20))))

    out = pl.pallas_call(
        _make_ffm_kernel(n_chunks, chunk),
        out_shape=jax.ShapeDtypeStruct((1, Bp), jnp.float32),
        grid_spec=pltpu.PrefetchScalarGridSpec(
            num_scalar_prefetch=0,
            grid=(n_steps,),
            in_specs=[
                pl.BlockSpec((PD, tb), lambda b: (0, b)),
                pl.BlockSpec((PD, tb), lambda b: (0, b)),
                pl.BlockSpec((1, tb), lambda b: (0, b)),
            ],
            out_specs=pl.BlockSpec((1, tb), lambda b: (0, b)),
        ),
        compiler_params=pltpu.CompilerParams(
            dimension_semantics=("parallel",),
            vmem_limit_bytes=vmem_limit,
        ),
        cost_estimate=cost,
    )(u_t, v_t, linbias)

    return out[0, :B].reshape(B, 1)


# ------------------------------ pure-JAX reference ---------------------------

def ffm_reference(x, cross_tables, linear_table, bias, field_dim, emb_dtype=None):
    """Transcription of the PyTorch forward.  emb_dtype (optional) rounds the
    gathered cross embeddings through that dtype to mirror the kernel's bf16 slabs."""
    B, F = x.shape
    offsets = jnp.asarray(np.concatenate([[0], np.cumsum(field_dim)[:-1]]),
                          dtype=jnp.int32)
    idx = x + offsets[None, :]
    embs = [cross_tables[f][idx] for f in range(F)]         # each (B, F, D)
    embeddings = jnp.concatenate(embs, axis=1)              # (B, F*F, D)
    if emb_dtype is not None:
        embeddings = embeddings.astype(emb_dtype).astype(jnp.float32)
    lin = linear_table[idx, 0]                              # (B, F)
    i1, i2 = [], []
    for i in range(F):
        for j in range(i + 1, F):
            i1.append(j * F + i)
            i2.append(i * F + j)
    cross = (embeddings[:, jnp.asarray(i1)] * embeddings[:, jnp.asarray(i2)]
             ).sum(axis=2).sum(axis=1, keepdims=True)       # (B, 1)
    return jax.nn.sigmoid(lin.sum(axis=1, keepdims=True) + bias + cross)


# ----------------------------------- tests -----------------------------------

if __name__ == "__main__":
    field_dim = (3, 5, 7, 4)               # per-field vocab sizes
    F = len(field_dim)
    D = 4                                  # embed_dim
    V = int(sum(field_dim))

    key = jax.random.PRNGKey(0)
    k1, k2, k3, k4, k5 = jax.random.split(key, 5)

    cross_tables = 0.1 * jax.random.normal(k1, (F, V, D), dtype=jnp.float32)
    linear_table = 0.1 * jax.random.normal(k2, (V, 1), dtype=jnp.float32)
    bias = jnp.full((1,), 0.05, dtype=jnp.float32)

    def make_x(k, batch):
        cols = []
        for f, nf in enumerate(field_dim):
            kf = jax.random.fold_in(k, f)
            cols.append(jax.random.randint(kf, (batch,), 0, nf, dtype=jnp.int32))
        return jnp.stack(cols, axis=1)                       # (batch, F)

    ffm_jit = jax.jit(ffm_forward, static_argnums=(4, 5),
                      static_argnames=("tb", "lane_chunk", "slab_dtype"))

    # 1) tiny batch -> auto tiling (single 128-wide padded tile)
    B1 = 8
    x1 = make_x(k3, B1)
    out1 = jax.block_until_ready(
        ffm_jit(x1, cross_tables, linear_table, bias, field_dim, D))
    assert out1.shape == (B1, 1)
    ref1_q = ffm_reference(x1, cross_tables, linear_table, bias, field_dim,
                           emb_dtype=jnp.bfloat16)
    np.testing.assert_allclose(np.asarray(out1), np.asarray(ref1_q),
                               rtol=1e-3, atol=1e-4)
    ref1_f32 = ffm_reference(x1, cross_tables, linear_table, bias, field_dim)
    np.testing.assert_allclose(np.asarray(out1), np.asarray(ref1_f32),
                               rtol=5e-3, atol=5e-3)

    # 2) multi-step grid with padding (B not a multiple of tb)
    B2 = 200
    x2 = make_x(k4, B2)
    out2 = jax.block_until_ready(
        ffm_jit(x2, cross_tables, linear_table, bias, field_dim, D, tb=128))
    assert out2.shape == (B2, 1)
    ref2_q = ffm_reference(x2, cross_tables, linear_table, bias, field_dim,
                           emb_dtype=jnp.bfloat16)
    np.testing.assert_allclose(np.asarray(out2), np.asarray(ref2_q),
                               rtol=1e-3, atol=1e-4)

    # 3) multi-step grid + in-kernel static lane chunking
    B3 = 1500
    x3 = make_x(k5, B3)
    out3 = jax.block_until_ready(
        ffm_jit(x3, cross_tables, linear_table, bias, field_dim, D,
                tb=512, lane_chunk=128))
    assert out3.shape == (B3, 1)
    ref3_q = ffm_reference(x3, cross_tables, linear_table, bias, field_dim,
                           emb_dtype=jnp.bfloat16)
    np.testing.assert_allclose(np.asarray(out3), np.asarray(ref3_q),
                               rtol=1e-3, atol=1e-4)

    print("KERNEL_OK")
</pallas_src>

<mosaic_0001>
module attributes {stable_mosaic.version = 11 : i64} {
  func.func @ffm_kernel(%arg0: i32, %arg1: memref<24x128xbf16, #tpu.memory_space<vmem>>, %arg2: memref<24x128xbf16, #tpu.memory_space<vmem>>, %arg3: memref<1x128xf32, #tpu.memory_space<vmem>>, %arg4: memref<1x128xf32, #tpu.memory_space<vmem>>) attributes {dimension_semantics = [#tpu.dimension_semantics<parallel>], iteration_bounds = array<i64: 1>, scalar_prefetch = 0 : i64, scratch_operands = 0 : i64, tpu.core_type = #tpu.core_type<tc>, window_params = [{transform_indices = @transform_0, window_bounds = array<i64: 24, 128>}, {transform_indices = @transform_1, window_bounds = array<i64: 24, 128>}, {transform_indices = @transform_2, window_bounds = array<i64: 1, 128>}, {transform_indices = @transform_3, window_bounds = array<i64: 1, 128>}]} {
    %c0 = arith.constant 0 : index
    %c0_0 = arith.constant 0 : index
    %0 = vector.load %arg1[%c0, %c0_0] : memref<24x128xbf16, #tpu.memory_space<vmem>>, vector<24x128xbf16>
    %1 = arith.extf %0 : vector<24x128xbf16> to vector<24x128xf32>
    %c0_1 = arith.constant 0 : index
    %c0_2 = arith.constant 0 : index
    %2 = vector.load %arg2[%c0_1, %c0_2] : memref<24x128xbf16, #tpu.memory_space<vmem>>, vector<24x128xbf16>
    %3 = arith.extf %2 : vector<24x128xbf16> to vector<24x128xf32>
    %4 = arith.mulf %1, %3 : vector<24x128xf32>
    %cst = arith.constant dense<0.000000e+00> : vector<128xf32>
    %5 = vector.multi_reduction <add>, %4, %cst [0] : vector<24x128xf32> to vector<128xf32>
    %6 = vector.shape_cast %5 : vector<128xf32> to vector<1x128xf32>
    %c0_3 = arith.constant 0 : index
    %c0_4 = arith.constant 0 : index
    %7 = vector.load %arg3[%c0_3, %c0_4] : memref<1x128xf32, #tpu.memory_space<vmem>>, vector<1x128xf32>
    %8 = arith.addf %6, %7 : vector<1x128xf32>
    %9 = arith.negf %8 : vector<1x128xf32>
    %10 = math.exp %9 : vector<1x128xf32>
    %cst_5 = arith.constant 1.000000e+00 : f32
    %11 = vector.broadcast %cst_5 : f32 to vector<1x128xf32>
    %12 = arith.addf %11, %10 : vector<1x128xf32>
    %13 = arith.divf %11, %12 : vector<1x128xf32>
    %c0_6 = arith.constant 0 : index
    %c0_7 = arith.constant 0 : index
    %14 = vector.load %arg4[%c0_6, %c0_7] : memref<1x128xf32, #tpu.memory_space<vmem>>, vector<1x128xf32>
    tpu.vector_store %arg4[%c0_6, %c0_7], %13 {strides = array<i32>} : memref<1x128xf32, #tpu.memory_space<vmem>>, vector<1x128xf32>,
    return
  }
  func.func @transform_0(%arg0: i32) -> (i32, i32) {
    %c0_i32 = arith.constant 0 : i32
    %c0_i32_0 = arith.constant 0 : i32
    return %c0_i32, %arg0 : i32, i32
  }
  func.func @transform_1(%arg0: i32) -> (i32, i32) {
    %c0_i32 = arith.constant 0 : i32
    %c0_i32_0 = arith.constant 0 : i32
    return %c0_i32, %arg0 : i32, i32
  }
  func.func @transform_2(%arg0: i32) -> (i32, i32) {
    %c0_i32 = arith.constant 0 : i32
    %c0_i32_0 = arith.constant 0 : i32
    return %c0_i32, %arg0 : i32, i32
  }
  func.func @transform_3(%arg0: i32) -> (i32, i32) {
    %c0_i32 = arith.constant 0 : i32
    %c0_i32_0 = arith.constant 0 : i32
    return %c0_i32, %arg0 : i32, i32
  }
}

</mosaic_0001>

<llo_original>
// kernel: ffm_forward.1
$region0: #{ffm_forward.1}
  #allocation0 [shape = 'u32[]', space=smem, size = 0x4, offset = 0x4, fixed_abs, tag = 'smem constant byte address 0x4 - core index']
  #allocation1 [shape = 'u32[144,128]{1,0:T(1,128)}', space=vmem, size = 0x12000, scoped, tag = 'internal scratch']
  %s0 = inlined_call_operand.vmem [shape: bf16[24,128], index: 0, kind: input, shape index: {}]
  %s1 = inlined_call_operand.vmem [shape: bf16[24,128], index: 1, kind: input, shape index: {}]
  %s2 = inlined_call_operand.vmem [shape: f32[1,128], index: 2, kind: input, shape index: {}]
  %s3 = inlined_call_operand.vmem [shape: f32[1,128], index: 3, kind: output, shape index: {}]
  %s4 = sld [smem:[#allocation0]]
  $region22: #{ffm_forward.1} parent=0
    _
  %s6 = ssub.s32 1, %s4
  %s7 = scalar_select 0, %s6, %s4
  // Predicated region
  $region2: #{ffm_forward.1} parent=0 // pred_check
    _
  $region3: #{ffm_forward.1} parent=0 // pred_check_branch
    %9 = sbr.rel (0) target = $region5
  $region4: #{ffm_forward.1} parent=0 // pred_region
    _
  $region5: #{ffm_forward.1} parent=0 // pred_fallthru
    _
  // Predicated region
  $region6: #{ffm_forward.1} parent=0 // pred_check
    _
  $region7: #{ffm_forward.1} parent=0 // pred_check_branch
    %11 = sbr.rel (0) target = $region9
  $region8: #{ffm_forward.1} parent=0 // pred_region
    _
  $region9: #{ffm_forward.1} parent=0 // pred_fallthru
    _
  // Predicated region
  $region10: #{ffm_forward.1} parent=0 // pred_check
    _
  $region11: #{ffm_forward.1} parent=0 // pred_check_branch
    %13 = sbr.rel (0) target = $region13
  $region12: #{ffm_forward.1} parent=0 // pred_region
    _
  $region13: #{ffm_forward.1} parent=0 // pred_fallthru
    _
  %v14 = vld [vmem:[%s0] sm:$0xf]
  %v15 = vld [vmem:[%s0 + $0x4] sm:$0xf]
  %v16 = vld [vmem:[%s0 + $0x8] sm:$0xf]
  %v17 = vunpack.c.l.bf16 %v14
  %v18 = vunpack.c.l.bf16 %v15
  %v19 = vunpack.c.l.bf16 %v16
  %v20 = vld [vmem:[%s1] sm:$0xf]
  %v21 = vld [vmem:[%s1 + $0x4] sm:$0xf]
  %v22 = vld [vmem:[%s1 + $0x8] sm:$0xf]
  %v23 = vunpack.c.l.bf16 %v20
  %v24 = vunpack.c.l.bf16 %v21
  %v25 = vunpack.c.l.bf16 %v22
  %v26 = vmul.f32 %v17, %v23
  %v27 = vmul.f32 %v18, %v24
  %v28 = vmul.f32 %v19, %v25
  %v29 = vadd.f32 %v26, %v27
  %v30 = vadd.f32 %v29, %v28
  %v31 = vrot.slane %v30, 4
  %v32 = vadd.f32 %v30, %v31
  %v33 = vrot.slane %v32, 2
  %v34 = vadd.f32 %v32, %v33
  %v35 = vrot.slane %v34, 1
  %v36 = vadd.f32 %v34, %v35
  %v37 = vld [vmem:[%s2] sm:$0x1]
  %v38 = vadd.f32 %v36, %v37
  %v39 = vxor.u32 %v38, 2147483648
  %v40 = vmul.f32 %v39, 1.442695
  %v41 = vpow.pop %v40
  %v42 = vadd.f32 %v41, 1.0
  %v43 = vrcp.pop %v42
  %v44 = vmul.f32 1.0, %v43
  %45 = vst [vmem:[%s3] sm:$0x1] %v44
  // Predicated region
  $region14: #{ffm_forward.1} parent=0 // pred_check
    _
  $region15: #{ffm_forward.1} parent=0 // pred_check_branch
    %47 = sbr.rel (0) target = $region17
  $region16: #{ffm_forward.1} parent=0 // pred_region
    _
  $region17: #{ffm_forward.1} parent=0 // pred_fallthru
    _
  // Predicated region
  $region18: #{ffm_forward.1} parent=0 // pred_check
    _
  $region19: #{ffm_forward.1} parent=0 // pred_check_branch
    %49 = sbr.rel (0) target = $region21
  $region20: #{ffm_forward.1} parent=0 // pred_region
    _
  $region21: #{ffm_forward.1} parent=0 // pred_fallthru
    _

</llo_original>
